<compile_context>
chip_gen: v5e
topology: v5e:2x2
jax: 0.10.0
libtpu: 0.0.40
codegen_flags: <defaults>
</compile_context>

<pallas_src>
import math

import jax
import jax.numpy as jnp
from jax.experimental import pallas as pl
from jax.experimental.pallas import tpu as pltpu


def rnn_kernel(tok_ref, h0_ref, wih_ref, whh_ref, brnn_ref, wlin_ref, blin_ref,
               out_ref, state_ref, y_scr, x_scr):
    """Whole forward pass in one invocation.

    tok_ref   : (S, B)    int32  SMEM (scalar prefetch) time-major tokens
    h0_ref    : (1, B, H) f32    initial hidden state
    wih_ref   : (V, 1, H) f32    W_ih^T rows (gather-friendly leading axis)
    whh_ref   : (H, H)    f32    W_hh^T
    brnn_ref  : (1, H)    f32    b_ih + b_hh
    wlin_ref  : (H, V)    f32    W_linear^T
    blin_ref  : (1, V)    f32    b_linear
    out_ref   : (S*B, V)  f32    logits (single writeback)
    state_ref : (1, B, H) f32    final hidden state (num_layers=1)
    y_scr     : (S*B, H)  f32    VMEM scratch: hidden states of every step
    x_scr     : (B, H)    f32    VMEM scratch: gathered x_t @ W_ih^T
    """
    S, B = tok_ref.shape

    # Hoist loop-invariant loads / broadcasts out of the recurrence.
    whh = whh_ref[...]                     # (H, H)
    brnn = brnn_ref[...]                   # (1, H)

    h = h0_ref[0]                          # (B, H)
    # Full static unroll over time (S is small); recurrence is inherently serial.
    for t in range(S):
        # x_t @ W_ih^T == row gather of W_ih^T at the token ids (one-hot input).
        for b in range(B):
            x_scr[pl.ds(b, 1), :] = wih_ref[tok_ref[t, b]]        # (1, H)
        h = jnp.tanh(
            x_scr[...]
            + jnp.dot(h, whh, preferred_element_type=jnp.float32)
            + brnn)
        y_scr[pl.ds(t * B, B), :] = h                             # stage hidden

    # Final state: written exactly once.
    state_ref[0] = h

    # Epilogue: one (S*B, H) x (H, V) matmul instead of S tiny ones, and a
    # single dense writeback of the full logits block.
    out_ref[...] = (jnp.dot(y_scr[...], wlin_ref[...],
                            preferred_element_type=jnp.float32)
                    + blin_ref[...])


def rnn_model_forward(tokens, state, params):
    """tokens: (B, S) int, state: (1, B, H) f32 -> (logits (S*B, V), state (1, B, H))."""
    B, S = tokens.shape
    V, _, H = params["wih_t"].shape

    tok_tm = jnp.transpose(tokens.astype(jnp.int32))              # (S, B) time-major

    out, new_state = pl.pallas_call(
        rnn_kernel,
        out_shape=(jax.ShapeDtypeStruct((S * B, V), jnp.float32),
                   jax.ShapeDtypeStruct((1, B, H), jnp.float32)),
        grid_spec=pltpu.PrefetchScalarGridSpec(
            num_scalar_prefetch=1,                                # tokens -> SMEM
            grid=(1,),
            in_specs=[
                pl.BlockSpec((1, B, H), lambda i, tok: (0, 0, 0)),  # h0
                pl.BlockSpec((V, 1, H), lambda i, tok: (0, 0, 0)),  # W_ih^T rows
                pl.BlockSpec((H, H), lambda i, tok: (0, 0)),        # W_hh^T
                pl.BlockSpec((1, H), lambda i, tok: (0, 0)),        # b_ih + b_hh
                pl.BlockSpec((H, V), lambda i, tok: (0, 0)),        # W_lin^T
                pl.BlockSpec((1, V), lambda i, tok: (0, 0)),        # b_lin
            ],
            out_specs=[
                pl.BlockSpec((S * B, V), lambda i, tok: (0, 0)),    # logits
                pl.BlockSpec((1, B, H), lambda i, tok: (0, 0, 0)),  # final state
            ],
            scratch_shapes=[
                pltpu.VMEM((S * B, H), jnp.float32),   # per-step hidden states
                pltpu.VMEM((B, H), jnp.float32),       # gathered input rows
            ],
        ),
        compiler_params=pltpu.CompilerParams(
            dimension_semantics=("arbitrary",)),
        # TODO(synk): for large batch on v7x, add a "parallel" batch-tile grid
        # axis to shard the independent batch work across the two TensorCores.
    )(tok_tm, state.astype(jnp.float32), params["wih_t"], params["whh_t"],
      params["brnn"], params["wlin_t"], params["blin"])

    return out, new_state


def init_params(key, vocab_size, num_hiddens):
    """Deterministic init mirroring PyTorch default U(-1/sqrt(H), 1/sqrt(H))."""
    ks = jax.random.split(key, 6)
    bound = 1.0 / math.sqrt(num_hiddens)
    u = lambda k, shape: jax.random.uniform(
        k, shape, dtype=jnp.float32, minval=-bound, maxval=bound)
    w_ih = u(ks[0], (num_hiddens, vocab_size))
    w_hh = u(ks[1], (num_hiddens, num_hiddens))
    b_ih = u(ks[2], (num_hiddens,))
    b_hh = u(ks[3], (num_hiddens,))
    w_lin = u(ks[4], (vocab_size, num_hiddens))
    b_lin = u(ks[5], (vocab_size,))
    return dict(
        # W_ih^T stored as (V, 1, H): leading axis is the gather axis.
        wih_t=jnp.transpose(w_ih).reshape(vocab_size, 1, num_hiddens),
        whh_t=jnp.transpose(w_hh),                       # (H, H)
        brnn=(b_ih + b_hh).reshape(1, num_hiddens),      # (1, H)
        wlin_t=jnp.transpose(w_lin),                     # (H, V)
        blin=b_lin.reshape(1, vocab_size),               # (1, V)
    )


def reference_forward(tokens, state, params):
    """Pure-JAX reference of the PyTorch forward."""
    B, S = tokens.shape
    wih = params["wih_t"][:, 0, :]                                   # (V, H)
    V, H = wih.shape
    x = jax.nn.one_hot(jnp.transpose(tokens), V, dtype=jnp.float32)  # (S, B, V)
    h = state[0]
    ys = []
    for t in range(S):
        h = jnp.tanh(x[t] @ wih + h @ params["whh_t"] + params["brnn"])
        ys.append(h)
    y = jnp.stack(ys, axis=0)                                        # (S, B, H)
    out = y.reshape(-1, H) @ params["wlin_t"] + params["blin"]
    return out, h[None]


if __name__ == "__main__":
    vocab_size = 28
    num_hiddens = 32
    batch = 2
    seq = 8

    key = jax.random.PRNGKey(0)
    k_tok, k_par = jax.random.split(key)

    tokens = jax.random.randint(k_tok, (batch, seq), 0, vocab_size, dtype=jnp.int32)
    state = jnp.zeros((1, batch, num_hiddens), dtype=jnp.float32)    # init_state
    params = init_params(k_par, vocab_size, num_hiddens)

    out, new_state = jax.jit(rnn_model_forward)(tokens, state, params)
    out = jax.block_until_ready(out)
    new_state = jax.block_until_ready(new_state)

    ref_out, ref_state = reference_forward(tokens, state, params)
    assert out.shape == (seq * batch, vocab_size)
    assert new_state.shape == (1, batch, num_hiddens)
    assert jnp.allclose(out, ref_out, atol=1e-5, rtol=1e-5)
    assert jnp.allclose(new_state, ref_state, atol=1e-5, rtol=1e-5)

    print("KERNEL_OK")
</pallas_src>

<mosaic_0001>
module attributes {stable_mosaic.version = 11 : i64} {
  func.func @rnn_kernel(%arg0: i32, %arg1: memref<8x2xi32, #tpu.memory_space<smem>>, %arg2: memref<1x2x32xf32, #tpu.memory_space<vmem>>, %arg3: memref<28x1x32xf32, #tpu.memory_space<vmem>>, %arg4: memref<32x32xf32, #tpu.memory_space<vmem>>, %arg5: memref<1x32xf32, #tpu.memory_space<vmem>>, %arg6: memref<32x28xf32, #tpu.memory_space<vmem>>, %arg7: memref<1x28xf32, #tpu.memory_space<vmem>>, %arg8: memref<16x28xf32, #tpu.memory_space<vmem>>, %arg9: memref<1x2x32xf32, #tpu.memory_space<vmem>>, %arg10: memref<16x32xf32, #tpu.memory_space<vmem>>, %arg11: memref<2x32xf32, #tpu.memory_space<vmem>>) attributes {dimension_semantics = [#tpu.dimension_semantics<arbitrary>], iteration_bounds = array<i64: 1>, scalar_prefetch = 1 : i64, scratch_operands = 2 : i64, tpu.core_type = #tpu.core_type<tc>, window_params = [{pipeline_mode = #tpu.pipeline_mode<synchronous>, transform_indices = @transform_0, window_bounds = array<i64: 1, 2, 32>}, {pipeline_mode = #tpu.pipeline_mode<synchronous>, transform_indices = @transform_1, window_bounds = array<i64: 28, 1, 32>}, {pipeline_mode = #tpu.pipeline_mode<synchronous>, transform_indices = @transform_2, window_bounds = array<i64: 32, 32>}, {pipeline_mode = #tpu.pipeline_mode<synchronous>, transform_indices = @transform_3, window_bounds = array<i64: 1, 32>}, {pipeline_mode = #tpu.pipeline_mode<synchronous>, transform_indices = @transform_4, window_bounds = array<i64: 32, 28>}, {pipeline_mode = #tpu.pipeline_mode<synchronous>, transform_indices = @transform_5, window_bounds = array<i64: 1, 28>}, {pipeline_mode = #tpu.pipeline_mode<synchronous>, transform_indices = @transform_6, window_bounds = array<i64: 16, 28>}, {pipeline_mode = #tpu.pipeline_mode<synchronous>, transform_indices = @transform_7, window_bounds = array<i64: 1, 2, 32>}]} {
    %c0 = arith.constant 0 : index
    %c0_0 = arith.constant 0 : index
    %0 = vector.load %arg4[%c0, %c0_0] : memref<32x32xf32, #tpu.memory_space<vmem>>, vector<32x32xf32>
    %c0_1 = arith.constant 0 : index
    %c0_2 = arith.constant 0 : index
    %1 = vector.load %arg5[%c0_1, %c0_2] : memref<1x32xf32, #tpu.memory_space<vmem>>, vector<1x32xf32>
    %c0_3 = arith.constant 0 : index
    %c0_4 = arith.constant 0 : index
    %c0_5 = arith.constant 0 : index
    %2 = vector.load %arg2[%c0_3, %c0_4, %c0_5] : memref<1x2x32xf32, #tpu.memory_space<vmem>>, vector<1x2x32xf32>
    %3 = vector.shape_cast %2 : vector<1x2x32xf32> to vector<2x32xf32>
    %c0_6 = arith.constant 0 : index
    %c0_7 = arith.constant 0 : index
    %4 = memref.load %arg1[%c0_6, %c0_7] : memref<8x2xi32, #tpu.memory_space<smem>>
    %5 = arith.index_cast %4 : i32 to index
    %c0_8 = arith.constant 0 : index
    %c0_9 = arith.constant 0 : index
    %6 = vector.load %arg3[%5, %c0_8, %c0_9] : memref<28x1x32xf32, #tpu.memory_space<vmem>>, vector<1x1x32xf32>
    %7 = vector.shape_cast %6 : vector<1x1x32xf32> to vector<1x32xf32>
    %c0_10 = arith.constant 0 : index
    %c0_11 = arith.constant 0 : index
    %8 = vector.load %arg11[%c0_10, %c0_11] : memref<2x32xf32, #tpu.memory_space<vmem>>, vector<1x32xf32>
    tpu.vector_store %arg11[%c0_10, %c0_11], %7 {strides = array<i32>} : memref<2x32xf32, #tpu.memory_space<vmem>>, vector<1x32xf32>,
    %c0_12 = arith.constant 0 : index
    %c1 = arith.constant 1 : index
    %9 = memref.load %arg1[%c0_12, %c1] : memref<8x2xi32, #tpu.memory_space<smem>>
    %10 = arith.index_cast %9 : i32 to index
    %c0_13 = arith.constant 0 : index
    %c0_14 = arith.constant 0 : index
    %11 = vector.load %arg3[%10, %c0_13, %c0_14] : memref<28x1x32xf32, #tpu.memory_space<vmem>>, vector<1x1x32xf32>
    %12 = vector.shape_cast %11 : vector<1x1x32xf32> to vector<1x32xf32>
    %c1_15 = arith.constant 1 : index
    %c0_16 = arith.constant 0 : index
    %13 = vector.load %arg11[%c1_15, %c0_16] : memref<2x32xf32, #tpu.memory_space<vmem>>, vector<1x32xf32>
    tpu.vector_store %arg11[%c1_15, %c0_16], %12 {strides = array<i32>} : memref<2x32xf32, #tpu.memory_space<vmem>>, vector<1x32xf32>,
    %c0_17 = arith.constant 0 : index
    %c0_18 = arith.constant 0 : index
    %14 = vector.load %arg11[%c0_17, %c0_18] : memref<2x32xf32, #tpu.memory_space<vmem>>, vector<2x32xf32>
    %cst = arith.constant dense<0.000000e+00> : vector<2x32xf32>
    %15 = tpu.matmul %3, %0, %cst {dimension_numbers = #tpu.dot_dimension_numbers<[1], [0], [0], [1], [0, 0, 1, 1], [], []>} : vector<2x32xf32>, vector<32x32xf32>, vector<2x32xf32> -> vector<2x32xf32>
    %16 = arith.addf %14, %15 : vector<2x32xf32>
    %17 = vector.broadcast %1 : vector<1x32xf32> to vector<2x32xf32>
    %18 = arith.addf %16, %17 : vector<2x32xf32>
    %19 = math.tanh %18 : vector<2x32xf32>
    %c0_19 = arith.constant 0 : index
    %c0_20 = arith.constant 0 : index
    %20 = vector.load %arg10[%c0_19, %c0_20] : memref<16x32xf32, #tpu.memory_space<vmem>>, vector<2x32xf32>
    tpu.vector_store %arg10[%c0_19, %c0_20], %19 {strides = array<i32>} : memref<16x32xf32, #tpu.memory_space<vmem>>, vector<2x32xf32>,
    %c1_21 = arith.constant 1 : index
    %c0_22 = arith.constant 0 : index
    %21 = memref.load %arg1[%c1_21, %c0_22] : memref<8x2xi32, #tpu.memory_space<smem>>
    %22 = arith.index_cast %21 : i32 to index
    %c0_23 = arith.constant 0 : index
    %c0_24 = arith.constant 0 : index
    %23 = vector.load %arg3[%22, %c0_23, %c0_24] : memref<28x1x32xf32, #tpu.memory_space<vmem>>, vector<1x1x32xf32>
    %24 = vector.shape_cast %23 : vector<1x1x32xf32> to vector<1x32xf32>
    %c0_25 = arith.constant 0 : index
    %c0_26 = arith.constant 0 : index
    %25 = vector.load %arg11[%c0_25, %c0_26] : memref<2x32xf32, #tpu.memory_space<vmem>>, vector<1x32xf32>
    tpu.vector_store %arg11[%c0_25, %c0_26], %24 {strides = array<i32>} : memref<2x32xf32, #tpu.memory_space<vmem>>, vector<1x32xf32>,
    %c1_27 = arith.constant 1 : index
    %c1_28 = arith.constant 1 : index
    %26 = memref.load %arg1[%c1_27, %c1_28] : memref<8x2xi32, #tpu.memory_space<smem>>
    %27 = arith.index_cast %26 : i32 to index
    %c0_29 = arith.constant 0 : index
    %c0_30 = arith.constant 0 : index
    %28 = vector.load %arg3[%27, %c0_29, %c0_30] : memref<28x1x32xf32, #tpu.memory_space<vmem>>, vector<1x1x32xf32>
    %29 = vector.shape_cast %28 : vector<1x1x32xf32> to vector<1x32xf32>
    %c1_31 = arith.constant 1 : index
    %c0_32 = arith.constant 0 : index
    %30 = vector.load %arg11[%c1_31, %c0_32] : memref<2x32xf32, #tpu.memory_space<vmem>>, vector<1x32xf32>
    tpu.vector_store %arg11[%c1_31, %c0_32], %29 {strides = array<i32>} : memref<2x32xf32, #tpu.memory_space<vmem>>, vector<1x32xf32>,
    %c0_33 = arith.constant 0 : index
    %c0_34 = arith.constant 0 : index
    %31 = vector.load %arg11[%c0_33, %c0_34] : memref<2x32xf32, #tpu.memory_space<vmem>>, vector<2x32xf32>
    %cst_35 = arith.constant dense<0.000000e+00> : vector<2x32xf32>
    %32 = tpu.matmul %19, %0, %cst_35 {dimension_numbers = #tpu.dot_dimension_numbers<[1], [0], [0], [1], [0, 0, 1, 1], [], []>} : vector<2x32xf32>, vector<32x32xf32>, vector<2x32xf32> -> vector<2x32xf32>
    %33 = arith.addf %31, %32 : vector<2x32xf32>
    %34 = vector.broadcast %1 : vector<1x32xf32> to vector<2x32xf32>
    %35 = arith.addf %33, %34 : vector<2x32xf32>
    %36 = math.tanh %35 : vector<2x32xf32>
    %c2 = arith.constant 2 : index
    %c0_36 = arith.constant 0 : index
    %37 = vector.load %arg10[%c2, %c0_36] : memref<16x32xf32, #tpu.memory_space<vmem>>, vector<2x32xf32>
    tpu.vector_store %arg10[%c2, %c0_36], %36 {strides = array<i32>} : memref<16x32xf32, #tpu.memory_space<vmem>>, vector<2x32xf32>,
    %c2_37 = arith.constant 2 : index
    %c0_38 = arith.constant 0 : index
    %38 = memref.load %arg1[%c2_37, %c0_38] : memref<8x2xi32, #tpu.memory_space<smem>>
    %39 = arith.index_cast %38 : i32 to index
    %c0_39 = arith.constant 0 : index
    %c0_40 = arith.constant 0 : index
    %40 = vector.load %arg3[%39, %c0_39, %c0_40] : memref<28x1x32xf32, #tpu.memory_space<vmem>>, vector<1x1x32xf32>
    %41 = vector.shape_cast %40 : vector<1x1x32xf32> to vector<1x32xf32>
    %c0_41 = arith.constant 0 : index
    %c0_42 = arith.constant 0 : index
    %42 = vector.load %arg11[%c0_41, %c0_42] : memref<2x32xf32, #tpu.memory_space<vmem>>, vector<1x32xf32>
    tpu.vector_store %arg11[%c0_41, %c0_42], %41 {strides = array<i32>} : memref<2x32xf32, #tpu.memory_space<vmem>>, vector<1x32xf32>,
    %c2_43 = arith.constant 2 : index
    %c1_44 = arith.constant 1 : index
    %43 = memref.load %arg1[%c2_43, %c1_44] : memref<8x2xi32, #tpu.memory_space<smem>>
    %44 = arith.index_cast %43 : i32 to index
    %c0_45 = arith.constant 0 : index
    %c0_46 = arith.constant 0 : index
    %45 = vector.load %arg3[%44, %c0_45, %c0_46] : memref<28x1x32xf32, #tpu.memory_space<vmem>>, vector<1x1x32xf32>
    %46 = vector.shape_cast %45 : vector<1x1x32xf32> to vector<1x32xf32>
    %c1_47 = arith.constant 1 : index
    %c0_48 = arith.constant 0 : index
    %47 = vector.load %arg11[%c1_47, %c0_48] : memref<2x32xf32, #tpu.memory_space<vmem>>, vector<1x32xf32>
    tpu.vector_store %arg11[%c1_47, %c0_48], %46 {strides = array<i32>} : memref<2x32xf32, #tpu.memory_space<vmem>>, vector<1x32xf32>,
    %c0_49 = arith.constant 0 : index
    %c0_50 = arith.constant 0 : index
    %48 = vector.load %arg11[%c0_49, %c0_50] : memref<2x32xf32, #tpu.memory_space<vmem>>, vector<2x32xf32>
    %cst_51 = arith.constant dense<0.000000e+00> : vector<2x32xf32>
    %49 = tpu.matmul %36, %0, %cst_51 {dimension_numbers = #tpu.dot_dimension_numbers<[1], [0], [0], [1], [0, 0, 1, 1], [], []>} : vector<2x32xf32>, vector<32x32xf32>, vector<2x32xf32> -> vector<2x32xf32>
    %50 = arith.addf %48, %49 : vector<2x32xf32>
    %51 = vector.broadcast %1 : vector<1x32xf32> to vector<2x32xf32>
    %52 = arith.addf %50, %51 : vector<2x32xf32>
    %53 = math.tanh %52 : vector<2x32xf32>
    %c4 = arith.constant 4 : index
    %c0_52 = arith.constant 0 : index
    %54 = vector.load %arg10[%c4, %c0_52] : memref<16x32xf32, #tpu.memory_space<vmem>>, vector<2x32xf32>
    tpu.vector_store %arg10[%c4, %c0_52], %53 {strides = array<i32>} : memref<16x32xf32, #tpu.memory_space<vmem>>, vector<2x32xf32>,
    %c3 = arith.constant 3 : index
    %c0_53 = arith.constant 0 : index
    %55 = memref.load %arg1[%c3, %c0_53] : memref<8x2xi32, #tpu.memory_space<smem>>
    %56 = arith.index_cast %55 : i32 to index
    %c0_54 = arith.constant 0 : index
    %c0_55 = arith.constant 0 : index
    %57 = vector.load %arg3[%56, %c0_54, %c0_55] : memref<28x1x32xf32, #tpu.memory_space<vmem>>, vector<1x1x32xf32>
    %58 = vector.shape_cast %57 : vector<1x1x32xf32> to vector<1x32xf32>
    %c0_56 = arith.constant 0 : index
    %c0_57 = arith.constant 0 : index
    %59 = vector.load %arg11[%c0_56, %c0_57] : memref<2x32xf32, #tpu.memory_space<vmem>>, vector<1x32xf32>
    tpu.vector_store %arg11[%c0_56, %c0_57], %58 {strides = array<i32>} : memref<2x32xf32, #tpu.memory_space<vmem>>, vector<1x32xf32>,
    %c3_58 = arith.constant 3 : index
    %c1_59 = arith.constant 1 : index
    %60 = memref.load %arg1[%c3_58, %c1_59] : memref<8x2xi32, #tpu.memory_space<smem>>
    %61 = arith.index_cast %60 : i32 to index
    %c0_60 = arith.constant 0 : index
    %c0_61 = arith.constant 0 : index
    %62 = vector.load %arg3[%61, %c0_60, %c0_61] : memref<28x1x32xf32, #tpu.memory_space<vmem>>, vector<1x1x32xf32>
    %63 = vector.shape_cast %62 : vector<1x1x32xf32> to vector<1x32xf32>
    %c1_62 = arith.constant 1 : index
    %c0_63 = arith.constant 0 : index
    %64 = vector.load %arg11[%c1_62, %c0_63] : memref<2x32xf32, #tpu.memory_space<vmem>>, vector<1x32xf32>
    tpu.vector_store %arg11[%c1_62, %c0_63], %63 {strides = array<i32>} : memref<2x32xf32, #tpu.memory_space<vmem>>, vector<1x32xf32>,
    %c0_64 = arith.constant 0 : index
    %c0_65 = arith.constant 0 : index
    %65 = vector.load %arg11[%c0_64, %c0_65] : memref<2x32xf32, #tpu.memory_space<vmem>>, vector<2x32xf32>
    %cst_66 = arith.constant dense<0.000000e+00> : vector<2x32xf32>
    %66 = tpu.matmul %53, %0, %cst_66 {dimension_numbers = #tpu.dot_dimension_numbers<[1], [0], [0], [1], [0, 0, 1, 1], [], []>} : vector<2x32xf32>, vector<32x32xf32>, vector<2x32xf32> -> vector<2x32xf32>
    %67 = arith.addf %65, %66 : vector<2x32xf32>
    %68 = vector.broadcast %1 : vector<1x32xf32> to vector<2x32xf32>
    %69 = arith.addf %67, %68 : vector<2x32xf32>
    %70 = math.tanh %69 : vector<2x32xf32>
    %c6 = arith.constant 6 : index
    %c0_67 = arith.constant 0 : index
    %71 = vector.load %arg10[%c6, %c0_67] : memref<16x32xf32, #tpu.memory_space<vmem>>, vector<2x32xf32>
    tpu.vector_store %arg10[%c6, %c0_67], %70 {strides = array<i32>} : memref<16x32xf32, #tpu.memory_space<vmem>>, vector<2x32xf32>,
    %c4_68 = arith.constant 4 : index
    %c0_69 = arith.constant 0 : index
    %72 = memref.load %arg1[%c4_68, %c0_69] : memref<8x2xi32, #tpu.memory_space<smem>>
    %73 = arith.index_cast %72 : i32 to index
    %c0_70 = arith.constant 0 : index
    %c0_71 = arith.constant 0 : index
    %74 = vector.load %arg3[%73, %c0_70, %c0_71] : memref<28x1x32xf32, #tpu.memory_space<vmem>>, vector<1x1x32xf32>
    %75 = vector.shape_cast %74 : vector<1x1x32xf32> to vector<1x32xf32>
    %c0_72 = arith.constant 0 : index
    %c0_73 = arith.constant 0 : index
    %76 = vector.load %arg11[%c0_72, %c0_73] : memref<2x32xf32, #tpu.memory_space<vmem>>, vector<1x32xf32>
    tpu.vector_store %arg11[%c0_72, %c0_73], %75 {strides = array<i32>} : memref<2x32xf32, #tpu.memory_space<vmem>>, vector<1x32xf32>,
    %c4_74 = arith.constant 4 : index
    %c1_75 = arith.constant 1 : index
    %77 = memref.load %arg1[%c4_74, %c1_75] : memref<8x2xi32, #tpu.memory_space<smem>>
    %78 = arith.index_cast %77 : i32 to index
    %c0_76 = arith.constant 0 : index
    %c0_77 = arith.constant 0 : index
    %79 = vector.load %arg3[%78, %c0_76, %c0_77] : memref<28x1x32xf32, #tpu.memory_space<vmem>>, vector<1x1x32xf32>
    %80 = vector.shape_cast %79 : vector<1x1x32xf32> to vector<1x32xf32>
    %c1_78 = arith.constant 1 : index
    %c0_79 = arith.constant 0 : index
    %81 = vector.load %arg11[%c1_78, %c0_79] : memref<2x32xf32, #tpu.memory_space<vmem>>, vector<1x32xf32>
    tpu.vector_store %arg11[%c1_78, %c0_79], %80 {strides = array<i32>} : memref<2x32xf32, #tpu.memory_space<vmem>>, vector<1x32xf32>,
    %c0_80 = arith.constant 0 : index
    %c0_81 = arith.constant 0 : index
    %82 = vector.load %arg11[%c0_80, %c0_81] : memref<2x32xf32, #tpu.memory_space<vmem>>, vector<2x32xf32>
    %cst_82 = arith.constant dense<0.000000e+00> : vector<2x32xf32>
    %83 = tpu.matmul %70, %0, %cst_82 {dimension_numbers = #tpu.dot_dimension_numbers<[1], [0], [0], [1], [0, 0, 1, 1], [], []>} : vector<2x32xf32>, vector<32x32xf32>, vector<2x32xf32> -> vector<2x32xf32>
    %84 = arith.addf %82, %83 : vector<2x32xf32>
    %85 = vector.broadcast %1 : vector<1x32xf32> to vector<2x32xf32>
    %86 = arith.addf %84, %85 : vector<2x32xf32>
    %87 = math.tanh %86 : vector<2x32xf32>
    %c8 = arith.constant 8 : index
    %c0_83 = arith.constant 0 : index
    %88 = vector.load %arg10[%c8, %c0_83] : memref<16x32xf32, #tpu.memory_space<vmem>>, vector<2x32xf32>
    tpu.vector_store %arg10[%c8, %c0_83], %87 {strides = array<i32>} : memref<16x32xf32, #tpu.memory_space<vmem>>, vector<2x32xf32>,
    %c5 = arith.constant 5 : index
    %c0_84 = arith.constant 0 : index
    %89 = memref.load %arg1[%c5, %c0_84] : memref<8x2xi32, #tpu.memory_space<smem>>
    %90 = arith.index_cast %89 : i32 to index
    %c0_85 = arith.constant 0 : index
    %c0_86 = arith.constant 0 : index
    %91 = vector.load %arg3[%90, %c0_85, %c0_86] : memref<28x1x32xf32, #tpu.memory_space<vmem>>, vector<1x1x32xf32>
    %92 = vector.shape_cast %91 : vector<1x1x32xf32> to vector<1x32xf32>
    %c0_87 = arith.constant 0 : index
    %c0_88 = arith.constant 0 : index
    %93 = vector.load %arg11[%c0_87, %c0_88] : memref<2x32xf32, #tpu.memory_space<vmem>>, vector<1x32xf32>
    tpu.vector_store %arg11[%c0_87, %c0_88], %92 {strides = array<i32>} : memref<2x32xf32, #tpu.memory_space<vmem>>, vector<1x32xf32>,
    %c5_89 = arith.constant 5 : index
    %c1_90 = arith.constant 1 : index
    %94 = memref.load %arg1[%c5_89, %c1_90] : memref<8x2xi32, #tpu.memory_space<smem>>
    %95 = arith.index_cast %94 : i32 to index
    %c0_91 = arith.constant 0 : index
    %c0_92 = arith.constant 0 : index
    %96 = vector.load %arg3[%95, %c0_91, %c0_92] : memref<28x1x32xf32, #tpu.memory_space<vmem>>, vector<1x1x32xf32>
    %97 = vector.shape_cast %96 : vector<1x1x32xf32> to vector<1x32xf32>
    %c1_93 = arith.constant 1 : index
    %c0_94 = arith.constant 0 : index
    %98 = vector.load %arg11[%c1_93, %c0_94] : memref<2x32xf32, #tpu.memory_space<vmem>>, vector<1x32xf32>
    tpu.vector_store %arg11[%c1_93, %c0_94], %97 {strides = array<i32>} : memref<2x32xf32, #tpu.memory_space<vmem>>, vector<1x32xf32>,
    %c0_95 = arith.constant 0 : index
    %c0_96 = arith.constant 0 : index
    %99 = vector.load %arg11[%c0_95, %c0_96] : memref<2x32xf32, #tpu.memory_space<vmem>>, vector<2x32xf32>
    %cst_97 = arith.constant dense<0.000000e+00> : vector<2x32xf32>
    %100 = tpu.matmul %87, %0, %cst_97 {dimension_numbers = #tpu.dot_dimension_numbers<[1], [0], [0], [1], [0, 0, 1, 1], [], []>} : vector<2x32xf32>, vector<32x32xf32>, vector<2x32xf32> -> vector<2x32xf32>
    %101 = arith.addf %99, %100 : vector<2x32xf32>
    %102 = vector.broadcast %1 : vector<1x32xf32> to vector<2x32xf32>
    %103 = arith.addf %101, %102 : vector<2x32xf32>
    %104 = math.tanh %103 : vector<2x32xf32>
    %c10 = arith.constant 10 : index
    %c0_98 = arith.constant 0 : index
    %105 = vector.load %arg10[%c10, %c0_98] : memref<16x32xf32, #tpu.memory_space<vmem>>, vector<2x32xf32>
    tpu.vector_store %arg10[%c10, %c0_98], %104 {strides = array<i32>} : memref<16x32xf32, #tpu.memory_space<vmem>>, vector<2x32xf32>,
    %c6_99 = arith.constant 6 : index
    %c0_100 = arith.constant 0 : index
    %106 = memref.load %arg1[%c6_99, %c0_100] : memref<8x2xi32, #tpu.memory_space<smem>>
    %107 = arith.index_cast %106 : i32 to index
    %c0_101 = arith.constant 0 : index
    %c0_102 = arith.constant 0 : index
    %108 = vector.load %arg3[%107, %c0_101, %c0_102] : memref<28x1x32xf32, #tpu.memory_space<vmem>>, vector<1x1x32xf32>
    %109 = vector.shape_cast %108 : vector<1x1x32xf32> to vector<1x32xf32>
    %c0_103 = arith.constant 0 : index
    %c0_104 = arith.constant 0 : index
    %110 = vector.load %arg11[%c0_103, %c0_104] : memref<2x32xf32, #tpu.memory_space<vmem>>, vector<1x32xf32>
    tpu.vector_store %arg11[%c0_103, %c0_104], %109 {strides = array<i32>} : memref<2x32xf32, #tpu.memory_space<vmem>>, vector<1x32xf32>,
    %c6_105 = arith.constant 6 : index
    %c1_106 = arith.constant 1 : index
    %111 = memref.load %arg1[%c6_105, %c1_106] : memref<8x2xi32, #tpu.memory_space<smem>>
    %112 = arith.index_cast %111 : i32 to index
    %c0_107 = arith.constant 0 : index
    %c0_108 = arith.constant 0 : index
    %113 = vector.load %arg3[%112, %c0_107, %c0_108] : memref<28x1x32xf32, #tpu.memory_space<vmem>>, vector<1x1x32xf32>
    %114 = vector.shape_cast %113 : vector<1x1x32xf32> to vector<1x32xf32>
    %c1_109 = arith.constant 1 : index
    %c0_110 = arith.constant 0 : index
    %115 = vector.load %arg11[%c1_109, %c0_110] : memref<2x32xf32, #tpu.memory_space<vmem>>, vector<1x32xf32>
    tpu.vector_store %arg11[%c1_109, %c0_110], %114 {strides = array<i32>} : memref<2x32xf32, #tpu.memory_space<vmem>>, vector<1x32xf32>,
    %c0_111 = arith.constant 0 : index
    %c0_112 = arith.constant 0 : index
    %116 = vector.load %arg11[%c0_111, %c0_112] : memref<2x32xf32, #tpu.memory_space<vmem>>, vector<2x32xf32>
    %cst_113 = arith.constant dense<0.000000e+00> : vector<2x32xf32>
    %117 = tpu.matmul %104, %0, %cst_113 {dimension_numbers = #tpu.dot_dimension_numbers<[1], [0], [0], [1], [0, 0, 1, 1], [], []>} : vector<2x32xf32>, vector<32x32xf32>, vector<2x32xf32> -> vector<2x32xf32>
    %118 = arith.addf %116, %117 : vector<2x32xf32>
    %119 = vector.broadcast %1 : vector<1x32xf32> to vector<2x32xf32>
    %120 = arith.addf %118, %119 : vector<2x32xf32>
    %121 = math.tanh %120 : vector<2x32xf32>
    %c12 = arith.constant 12 : index
    %c0_114 = arith.constant 0 : index
    %122 = vector.load %arg10[%c12, %c0_114] : memref<16x32xf32, #tpu.memory_space<vmem>>, vector<2x32xf32>
    tpu.vector_store %arg10[%c12, %c0_114], %121 {strides = array<i32>} : memref<16x32xf32, #tpu.memory_space<vmem>>, vector<2x32xf32>,
    %c7 = arith.constant 7 : index
    %c0_115 = arith.constant 0 : index
    %123 = memref.load %arg1[%c7, %c0_115] : memref<8x2xi32, #tpu.memory_space<smem>>
    %124 = arith.index_cast %123 : i32 to index
    %c0_116 = arith.constant 0 : index
    %c0_117 = arith.constant 0 : index
    %125 = vector.load %arg3[%124, %c0_116, %c0_117] : memref<28x1x32xf32, #tpu.memory_space<vmem>>, vector<1x1x32xf32>
    %126 = vector.shape_cast %125 : vector<1x1x32xf32> to vector<1x32xf32>
    %c0_118 = arith.constant 0 : index
    %c0_119 = arith.constant 0 : index
    %127 = vector.load %arg11[%c0_118, %c0_119] : memref<2x32xf32, #tpu.memory_space<vmem>>, vector<1x32xf32>
    tpu.vector_store %arg11[%c0_118, %c0_119], %126 {strides = array<i32>} : memref<2x32xf32, #tpu.memory_space<vmem>>, vector<1x32xf32>,
    %c7_120 = arith.constant 7 : index
    %c1_121 = arith.constant 1 : index
    %128 = memref.load %arg1[%c7_120, %c1_121] : memref<8x2xi32, #tpu.memory_space<smem>>
    %129 = arith.index_cast %128 : i32 to index
    %c0_122 = arith.constant 0 : index
    %c0_123 = arith.constant 0 : index
    %130 = vector.load %arg3[%129, %c0_122, %c0_123] : memref<28x1x32xf32, #tpu.memory_space<vmem>>, vector<1x1x32xf32>
    %131 = vector.shape_cast %130 : vector<1x1x32xf32> to vector<1x32xf32>
    %c1_124 = arith.constant 1 : index
    %c0_125 = arith.constant 0 : index
    %132 = vector.load %arg11[%c1_124, %c0_125] : memref<2x32xf32, #tpu.memory_space<vmem>>, vector<1x32xf32>
    tpu.vector_store %arg11[%c1_124, %c0_125], %131 {strides = array<i32>} : memref<2x32xf32, #tpu.memory_space<vmem>>, vector<1x32xf32>,
    %c0_126 = arith.constant 0 : index
    %c0_127 = arith.constant 0 : index
    %133 = vector.load %arg11[%c0_126, %c0_127] : memref<2x32xf32, #tpu.memory_space<vmem>>, vector<2x32xf32>
    %cst_128 = arith.constant dense<0.000000e+00> : vector<2x32xf32>
    %134 = tpu.matmul %121, %0, %cst_128 {dimension_numbers = #tpu.dot_dimension_numbers<[1], [0], [0], [1], [0, 0, 1, 1], [], []>} : vector<2x32xf32>, vector<32x32xf32>, vector<2x32xf32> -> vector<2x32xf32>
    %135 = arith.addf %133, %134 : vector<2x32xf32>
    %136 = vector.broadcast %1 : vector<1x32xf32> to vector<2x32xf32>
    %137 = arith.addf %135, %136 : vector<2x32xf32>
    %138 = math.tanh %137 : vector<2x32xf32>
    %c14 = arith.constant 14 : index
    %c0_129 = arith.constant 0 : index
    %139 = vector.load %arg10[%c14, %c0_129] : memref<16x32xf32, #tpu.memory_space<vmem>>, vector<2x32xf32>
    tpu.vector_store %arg10[%c14, %c0_129], %138 {strides = array<i32>} : memref<16x32xf32, #tpu.memory_space<vmem>>, vector<2x32xf32>,
    %c0_130 = arith.constant 0 : index
    %c0_131 = arith.constant 0 : index
    %c0_132 = arith.constant 0 : index
    %140 = vector.load %arg9[%c0_130, %c0_131, %c0_132] : memref<1x2x32xf32, #tpu.memory_space<vmem>>, vector<1x2x32xf32>
    %141 = vector.shape_cast %140 : vector<1x2x32xf32> to vector<2x32xf32>
    %142 = vector.shape_cast %138 : vector<2x32xf32> to vector<1x2x32xf32>
    tpu.vector_store %arg9[%c0_130, %c0_131, %c0_132], %142 {strides = array<i32>} : memref<1x2x32xf32, #tpu.memory_space<vmem>>, vector<1x2x32xf32>,
    %c0_133 = arith.constant 0 : index
    %c0_134 = arith.constant 0 : index
    %143 = vector.load %arg10[%c0_133, %c0_134] : memref<16x32xf32, #tpu.memory_space<vmem>>, vector<16x32xf32>
    %c0_135 = arith.constant 0 : index
    %c0_136 = arith.constant 0 : index
    %144 = vector.load %arg6[%c0_135, %c0_136] : memref<32x28xf32, #tpu.memory_space<vmem>>, vector<32x28xf32>
    %cst_137 = arith.constant dense<0.000000e+00> : vector<16x28xf32>
    %145 = tpu.matmul %143, %144, %cst_137 {dimension_numbers = #tpu.dot_dimension_numbers<[1], [0], [0], [1], [0, 0, 1, 1], [], []>} : vector<16x32xf32>, vector<32x28xf32>, vector<16x28xf32> -> vector<16x28xf32>
    %c0_138 = arith.constant 0 : index
    %c0_139 = arith.constant 0 : index
    %146 = vector.load %arg7[%c0_138, %c0_139] : memref<1x28xf32, #tpu.memory_space<vmem>>, vector<1x28xf32>
    %147 = vector.broadcast %146 : vector<1x28xf32> to vector<16x28xf32>
    %148 = arith.addf %145, %147 : vector<16x28xf32>
    %c0_140 = arith.constant 0 : index
    %c0_141 = arith.constant 0 : index
    %149 = vector.load %arg8[%c0_140, %c0_141] : memref<16x28xf32, #tpu.memory_space<vmem>>, vector<16x28xf32>
    tpu.vector_store %arg8[%c0_140, %c0_141], %148 {strides = array<i32>} : memref<16x28xf32, #tpu.memory_space<vmem>>, vector<16x28xf32>,
    return
  }
  func.func @transform_0(%arg0: i32, %arg1: memref<8x2xi32, #tpu.memory_space<smem>>) -> (i32, i32, i32) {
    %c0_i32 = arith.constant 0 : i32
    %c0_i32_0 = arith.constant 0 : i32
    %c0_i32_1 = arith.constant 0 : i32
    %c0_i32_2 = arith.constant 0 : i32
    return %c0_i32, %c0_i32_0, %c0_i32_1 : i32, i32, i32
  }
  func.func @transform_1(%arg0: i32, %arg1: memref<8x2xi32, #tpu.memory_space<smem>>) -> (i32, i32, i32) {
    %c0_i32 = arith.constant 0 : i32
    %c0_i32_0 = arith.constant 0 : i32
    %c0_i32_1 = arith.constant 0 : i32
    %c0_i32_2 = arith.constant 0 : i32
    return %c0_i32, %c0_i32_0, %c0_i32_1 : i32, i32, i32
  }
  func.func @transform_2(%arg0: i32, %arg1: memref<8x2xi32, #tpu.memory_space<smem>>) -> (i32, i32) {
    %c0_i32 = arith.constant 0 : i32
    %c0_i32_0 = arith.constant 0 : i32
    %c0_i32_1 = arith.constant 0 : i32
    return %c0_i32, %c0_i32_0 : i32, i32
  }
  func.func @transform_3(%arg0: i32, %arg1: memref<8x2xi32, #tpu.memory_space<smem>>) -> (i32, i32) {
    %c0_i32 = arith.constant 0 : i32
    %c0_i32_0 = arith.constant 0 : i32
    %c0_i32_1 = arith.constant 0 : i32
    return %c0_i32, %c0_i32_0 : i32, i32
  }
  func.func @transform_4(%arg0: i32, %arg1: memref<8x2xi32, #tpu.memory_space<smem>>) -> (i32, i32) {
    %c0_i32 = arith.constant 0 : i32
    %c0_i32_0 = arith.constant 0 : i32
    %c0_i32_1 = arith.constant 0 : i32
    return %c0_i32, %c0_i32_0 : i32, i32
  }
  func.func @transform_5(%arg0: i32, %arg1: memref<8x2xi32, #tpu.memory_space<smem>>) -> (i32, i32) {
    %c0_i32 = arith.constant 0 : i32
    %c0_i32_0 = arith.constant 0 : i32
    %c0_i32_1 = arith.constant 0 : i32
    return %c0_i32, %c0_i32_0 : i32, i32
  }
  func.func @transform_6(%arg0: i32, %arg1: memref<8x2xi32, #tpu.memory_space<smem>>) -> (i32, i32) {
    %c0_i32 = arith.constant 0 : i32
    %c0_i32_0 = arith.constant 0 : i32
    %c0_i32_1 = arith.constant 0 : i32
    return %c0_i32, %c0_i32_0 : i32, i32
  }
  func.func @transform_7(%arg0: i32, %arg1: memref<8x2xi32, #tpu.memory_space<smem>>) -> (i32, i32, i32) {
    %c0_i32 = arith.constant 0 : i32
    %c0_i32_0 = arith.constant 0 : i32
    %c0_i32_1 = arith.constant 0 : i32
    %c0_i32_2 = arith.constant 0 : i32
    return %c0_i32, %c0_i32_0, %c0_i32_1 : i32, i32, i32
  }
}

</mosaic_0001>

<llo_original>
// kernel: rnn_model_forward.1
$region0: #{rnn_model_forward.1}
  #allocation0 [shape = 'u32[]', space=smem, size = 0x4, offset = 0x4, fixed_abs, tag = 'smem constant byte address 0x4 - core index']
  #allocation1 [shape = 'u32[72,128]{1,0:T(1,128)}', space=vmem, size = 0x9000, scoped, tag = 'internal scratch']
  #allocation2 [shape = 'f32[16,32]{1,0:T(8,128)}', space=vmem, size = 0x2000, scoped, tag = 'scratch operand']
  #allocation3 [shape = 'f32[2,32]{1,0:T(2,128)}', space=vmem, size = 0x400, scoped, tag = 'scratch operand']
  #allocation4 [shape = 's32[1]{0}', space=sflag, size = 0x4, scoped, tag = 'scoped memory for rnn_model_forward.1']
  #allocation5 [shape = 'u8[4096]{0}', space=smem, size = 0x1000, scoped, tag = 'prefetched SMEM operand 0']
  %s0 = inlined_call_operand.vmem [shape: s32[8,2], index: 0, kind: input, shape index: {}]
  %s1 = inlined_call_operand.vmem [shape: f32[1,2,32], index: 1, kind: input, shape index: {}]
  %s2 = inlined_call_operand.hbm [shape: f32[28,1,32], index: 2, kind: input, shape index: {}]
  %s3 = inlined_call_operand.hbm [shape: f32[32,32], index: 3, kind: input, shape index: {}]
  %s4 = inlined_call_operand.vmem [shape: f32[1,32], index: 4, kind: input, shape index: {}]
  %s5 = inlined_call_operand.hbm [shape: f32[32,28], index: 5, kind: input, shape index: {}]
  %s6 = inlined_call_operand.vmem [shape: f32[1,28], index: 6, kind: input, shape index: {}]
  %s7 = inlined_call_operand.hbm [shape: f32[16,28], index: 7, kind: output, shape index: {0}]
  %s8 = inlined_call_operand.hbm [shape: f32[1,2,32], index: 8, kind: output, shape index: {1}]
  %9 = xla_tuple %s7, %s8
  %s10 = sld [smem:[#allocation0]]
  $region54: #{rnn_model_forward.1} parent=0
    _
  %s12 = ssub.s32 1, %s10
  %s13 = scalar_select 0, %s12, %s10
  %s15 = sshll.u32 %s0, 4
  %s16 = int_to_ptr.vmem [resolvable:$true] %s15
  %18 = dma.vmem_to_smem %s16, 128, [#allocation5], [#allocation4]
  %20 = dma.done [#allocation4], 128
  %21 = sfence
  $region1: #{rnn_model_forward.1} parent=0
    #allocation6 [shape = 'u8[14336]{0}', space=vmem, size = 0x3800, scoped, tag = 'input window, operand 2, single buffered']
    #allocation7 [shape = 's32[1]{0}', space=sflag, size = 0x4, scoped, tag = 'scoped memory for rnn_model_forward.1']
    #allocation8 [shape = 's32[1]{0}', space=sflag, size = 0x4, scoped, tag = 'scoped memory for rnn_model_forward.1']
    #allocation9 [shape = 'u8[16384]{0}', space=vmem, size = 0x4000, scoped, tag = 'input window, operand 3, single buffered']
    #allocation10 [shape = 's32[1]{0}', space=sflag, size = 0x4, scoped, tag = 'scoped memory for rnn_model_forward.1']
    #allocation11 [shape = 'u8[16384]{0}', space=vmem, size = 0x4000, scoped, tag = 'input window, operand 5, single buffered']
    #allocation12 [shape = 'u8[8192]{0}', space=vmem, size = 0x2000, scoped, tag = 'output window, operand 0, single buffered']
    #allocation13 [shape = 'u8[1024]{0}', space=vmem, size = 0x400, scoped, tag = 'output window, operand 1, single buffered']
    #allocation14 [shape = 's32[1]{0}', space=sflag, size = 0x4, scoped, tag = 'scoped memory for rnn_model_forward.1']
    %22 = vsyncpa [#allocation7], 0
    %23 = vsyncpa [#allocation10], 0
    %24 = vsyncpa [#allocation8], 0
    %25 = vsyncpa [#allocation14], 0
    // Predicated region
    $region2: #{rnn_model_forward.1} parent=1 // pred_check
      _
    $region3: #{rnn_model_forward.1} parent=1 // pred_check_branch
      %27 = sbr.rel (0) target = $region5
    $region4: #{rnn_model_forward.1} parent=1 // pred_region
      _
    $region5: #{rnn_model_forward.1} parent=1 // pred_fallthru
      _
    // Predicated region
    $region6: #{rnn_model_forward.1} parent=1 // pred_check
      _
    $region7: #{rnn_model_forward.1} parent=1 // pred_check_branch
      %29 = sbr.rel (0) target = $region9
    $region8: #{rnn_model_forward.1} parent=1 // pred_region
      %31 = vsyncadd [#allocation7], 0
      %s32 = sshll.u32 %s2, 4
      %s33 = int_to_ptr.hbm [resolvable:$true] %s32
      %s34 = sshll.u32 [#allocation6], 4
      %s35 = int_to_ptr.vmem [resolvable:$true] %s34
      %40 = dma.hbm_to_vmem [thread:$0]  %s33, 448, %s35, [#allocation7], 16, 16, 1
    $region9: #{rnn_model_forward.1} parent=1 // pred_fallthru
      _
    // Predicated region
    $region10: #{rnn_model_forward.1} parent=1 // pred_check
      _
    $region11: #{rnn_model_forward.1} parent=1 // pred_check_branch
      %42 = sbr.rel (0) target = $region13
    $region12: #{rnn_model_forward.1} parent=1 // pred_region
      %44 = vsyncadd [#allocation10], 0
      %s45 = sshll.u32 %s3, 4
      %s46 = int_to_ptr.hbm [resolvable:$true] %s45
      %s47 = sshll.u32 [#allocation9], 4
      %s48 = int_to_ptr.vmem [resolvable:$true] %s47
      %53 = dma.hbm_to_vmem [thread:$0]  %s46, 512, %s48, [#allocation10], 128, 128, 8
    $region13: #{rnn_model_forward.1} parent=1 // pred_fallthru
      _
    // Predicated region
    $region14: #{rnn_model_forward.1} parent=1 // pred_check
      _
    $region15: #{rnn_model_forward.1} parent=1 // pred_check_branch
      %55 = sbr.rel (0) target = $region17
    $region16: #{rnn_model_forward.1} parent=1 // pred_region
      _
    $region17: #{rnn_model_forward.1} parent=1 // pred_fallthru
      _
    // Predicated region
    $region18: #{rnn_model_forward.1} parent=1 // pred_check
      _
    $region19: #{rnn_model_forward.1} parent=1 // pred_check_branch
      %57 = sbr.rel (0) target = $region21
    $region20: #{rnn_model_forward.1} parent=1 // pred_region
      %59 = vsyncadd [#allocation10], 0
      %s60 = sshll.u32 %s5, 4
      %s61 = int_to_ptr.hbm [resolvable:$true] %s60
      %s62 = sshll.u32 [#allocation11], 4
      %s63 = int_to_ptr.vmem [resolvable:$true] %s62
      %68 = dma.hbm_to_vmem [thread:$0]  %s61, 512, %s63, [#allocation10], 128, 128, 8
    $region21: #{rnn_model_forward.1} parent=1 // pred_fallthru
      _
    // Predicated region
    $region22: #{rnn_model_forward.1} parent=1 // pred_check
      _
    $region23: #{rnn_model_forward.1} parent=1 // pred_check_branch
      %70 = sbr.rel (0) target = $region25
    $region24: #{rnn_model_forward.1} parent=1 // pred_region
      _
    $region25: #{rnn_model_forward.1} parent=1 // pred_fallthru
      _
    // Predicated region
    $region26: #{rnn_model_forward.1} parent=1 // pred_check
      _
    $region27: #{rnn_model_forward.1} parent=1 // pred_check_branch
      %72 = sbr.rel (0) target = $region29
    $region28: #{rnn_model_forward.1} parent=1 // pred_region
      %74 = dma.done [#allocation7], 448
    $region29: #{rnn_model_forward.1} parent=1 // pred_fallthru
      _
    // Predicated region
    $region30: #{rnn_model_forward.1} parent=1 // pred_check
      _
    $region31: #{rnn_model_forward.1} parent=1 // pred_check_branch
      %76 = sbr.rel (0) target = $region33
    $region32: #{rnn_model_forward.1} parent=1 // pred_region
      %78 = dma.done [#allocation10], 512
    $region33: #{rnn_model_forward.1} parent=1 // pred_fallthru
      _
    // Predicated region
    $region34: #{rnn_model_forward.1} parent=1 // pred_check
      _
    $region35: #{rnn_model_forward.1} parent=1 // pred_check_branch
      %80 = sbr.rel (0) target = $region37
    $region36: #{rnn_model_forward.1} parent=1 // pred_region
      %82 = dma.done [#allocation10], 512
    $region37: #{rnn_model_forward.1} parent=1 // pred_fallthru
      _
    %v83 = vld [vmem:[#allocation9] sm:$0xff]
    %v84 = vld [vmem:[#allocation9 + $0x8] sm:$0xff]
    %v85 = vld [vmem:[#allocation9 + $0x10] sm:$0xff]
    %v86 = vld [vmem:[#allocation9 + $0x18] sm:$0xff]
    %v87 = vld [vmem:[%s4] sm:$0x1]
    %v88 = vld [vmem:[%s1] sm:$0x3]
    %s89 = sld [smem:[#allocation5]]
    %s90 = scalar_lea.vmem [#allocation6], %s89
    %v91 = vld [vmem:[%s90] sm:$0x1]
    %vm92 = vcmask 253952
    %93 = vst.msk [vmem:[#allocation3] sm:$0x1] %vm92, %v91
    %s94 = sld [smem:[#allocation5 + $0x1]]
    %s95 = scalar_lea.vmem [#allocation6], %s94
    %v96 = vld [vmem:[%s95] sm:$0x1]
    %97 = vst.msk [vmem:[#allocation3 + $0x1] sm:$0x1] %vm92, %v96
    %v98 = vld [vmem:[#allocation3] sm:$0x3]
    %vm99 = vcmask 261120
    %v101 = vsel %vm99, %v88, 0
    %103 = vmatpush.msra.mxu0 0.0
    %104 = vmatpush.msra.mxu0 0.0
    %105 = vmatpush.msra.mxu0 0.0
    %106 = vmatpush.msra.mxu0 0.0
    %107 = vmatpush.msra.mxu0 0.0
    %108 = vmatpush.msra.mxu0 0.0
    %109 = vmatpush.msra.mxu0 0.0
    %110 = vmatpush.msra.mxu0 0.0
    %111 = vmatpush.msra.mxu0 0.0
    %112 = vmatpush.msra.mxu0 0.0
    %113 = vmatpush.msra.mxu0 0.0
    %114 = vmatpush.msra.mxu0 0.0
    %115 = vmatpush.msra.mxu0 %v86
    %116 = vmatpush.msra.mxu0 %v85
    %117 = vmatpush.msra.mxu0 %v84
    %118 = vmatpush.msra.mxu0 %v83
    %119 = vmatmul.f32.gmra.mxu0 %v101
    %v120 = vpop.f32.mrf.mxu0
    %v121 = vadd.f32 0.0, %v120
    %122 = vdwg.mxu0
    %v123 = vadd.f32 %v98, %v121
    %v125 = vperm.slane %v87, 0
    %v127 = vadd.f32 %v123, %v125
    %v128 = vtanh.pop %v127
    %vm129 = vcmask 254976
    %130 = vst.msk [vmem:[#allocation2] sm:$0x3] %vm129, %v128
    %s131 = sld [smem:[#allocation5 + $0x80]]
    %s132 = scalar_lea.vmem [#allocation6], %s131
    %v133 = vld [vmem:[%s132] sm:$0x1]
    %134 = vst.msk [vmem:[#allocation3] sm:$0x1] %vm92, %v133
    %s135 = sld [smem:[#allocation5 + $0x81]]
    %s136 = scalar_lea.vmem [#allocation6], %s135
    %v137 = vld [vmem:[%s136] sm:$0x1]
    %138 = vst.msk [vmem:[#allocation3 + $0x1] sm:$0x1] %vm92, %v137
    %v139 = vld [vmem:[#allocation3] sm:$0x3]
    %v141 = vsel %vm99, %v128, 0
    %143 = vmatpush.msra.mxu0 0.0
    %144 = vmatpush.msra.mxu0 0.0
    %145 = vmatpush.msra.mxu0 0.0
    %146 = vmatpush.msra.mxu0 0.0
    %147 = vmatpush.msra.mxu0 0.0
    %148 = vmatpush.msra.mxu0 0.0
    %149 = vmatpush.msra.mxu0 0.0
    %150 = vmatpush.msra.mxu0 0.0
    %151 = vmatpush.msra.mxu0 0.0
    %152 = vmatpush.msra.mxu0 0.0
    %153 = vmatpush.msra.mxu0 0.0
    %154 = vmatpush.msra.mxu0 0.0
    %155 = vmatpush.msra.mxu0 %v86
    %156 = vmatpush.msra.mxu0 %v85
    %157 = vmatpush.msra.mxu0 %v84
    %158 = vmatpush.msra.mxu0 %v83
    %159 = vmatmul.f32.gmra.mxu0 %v141
    %v160 = vpop.f32.mrf.mxu0
    %v161 = vadd.f32 0.0, %v160
    %162 = vdwg.mxu0
    %v163 = vadd.f32 %v139, %v161
    %v164 = vadd.f32 %v163, %v125
    %v165 = vtanh.pop %v164
    %166 = vst.msk [vmem:[#allocation2 + $0x2] sm:$0x3] %vm129, %v165
    %s167 = sld [smem:[#allocation5 + $0x100]]
    %s168 = scalar_lea.vmem [#allocation6], %s167
    %v169 = vld [vmem:[%s168] sm:$0x1]
    %170 = vst.msk [vmem:[#allocation3] sm:$0x1] %vm92, %v169
    %s171 = sld [smem:[#allocation5 + $0x101]]
    %s172 = scalar_lea.vmem [#allocation6], %s171
    %v173 = vld [vmem:[%s172] sm:$0x1]
    %174 = vst.msk [vmem:[#allocation3 + $0x1] sm:$0x1] %vm92, %v173
    %v175 = vld [vmem:[#allocation3] sm:$0x3]
    %v177 = vsel %vm99, %v165, 0
    %179 = vmatpush.msra.mxu0 0.0
    %180 = vmatpush.msra.mxu0 0.0
    %181 = vmatpush.msra.mxu0 0.0
    %182 = vmatpush.msra.mxu0 0.0
    %183 = vmatpush.msra.mxu0 0.0
    %184 = vmatpush.msra.mxu0 0.0
    %185 = vmatpush.msra.mxu0 0.0
    %186 = vmatpush.msra.mxu0 0.0
    %187 = vmatpush.msra.mxu0 0.0
    %188 = vmatpush.msra.mxu0 0.0
    %189 = vmatpush.msra.mxu0 0.0
    %190 = vmatpush.msra.mxu0 0.0
    %191 = vmatpush.msra.mxu0 %v86
    %192 = vmatpush.msra.mxu0 %v85
    %193 = vmatpush.msra.mxu0 %v84
    %194 = vmatpush.msra.mxu0 %v83
    %195 = vmatmul.f32.gmra.mxu0 %v177
    %v196 = vpop.f32.mrf.mxu0
    %v197 = vadd.f32 0.0, %v196
    %198 = vdwg.mxu0
    %v199 = vadd.f32 %v175, %v197
    %v200 = vadd.f32 %v199, %v125
    %v201 = vtanh.pop %v200
    %202 = vst.msk [vmem:[#allocation2 + $0x4] sm:$0x3] %vm129, %v201
    %s203 = sld [smem:[#allocation5 + $0x180]]
    %s204 = scalar_lea.vmem [#allocation6], %s203
    %v205 = vld [vmem:[%s204] sm:$0x1]
    %206 = vst.msk [vmem:[#allocation3] sm:$0x1] %vm92, %v205
    %s207 = sld [smem:[#allocation5 + $0x181]]
    %s208 = scalar_lea.vmem [#allocation6], %s207
    %v209 = vld [vmem:[%s208] sm:$0x1]
    %210 = vst.msk [vmem:[#allocation3 + $0x1] sm:$0x1] %vm92, %v209
    %v211 = vld [vmem:[#allocation3] sm:$0x3]
    %v213 = vsel %vm99, %v201, 0
    %215 = vmatpush.msra.mxu0 0.0
    %216 = vmatpush.msra.mxu0 0.0
    %217 = vmatpush.msra.mxu0 0.0
    %218 = vmatpush.msra.mxu0 0.0
    %219 = vmatpush.msra.mxu0 0.0
    %220 = vmatpush.msra.mxu0 0.0
    %221 = vmatpush.msra.mxu0 0.0
    %222 = vmatpush.msra.mxu0 0.0
    %223 = vmatpush.msra.mxu0 0.0
    %224 = vmatpush.msra.mxu0 0.0
    %225 = vmatpush.msra.mxu0 0.0
    %226 = vmatpush.msra.mxu0 0.0
    %227 = vmatpush.msra.mxu0 %v86
    %228 = vmatpush.msra.mxu0 %v85
    %229 = vmatpush.msra.mxu0 %v84
    %230 = vmatpush.msra.mxu0 %v83
    %231 = vmatmul.f32.gmra.mxu0 %v213
    %v232 = vpop.f32.mrf.mxu0
    %v233 = vadd.f32 0.0, %v232
    %234 = vdwg.mxu0
    %v235 = vadd.f32 %v211, %v233
    %v236 = vadd.f32 %v235, %v125
    %v237 = vtanh.pop %v236
    %238 = vst.msk [vmem:[#allocation2 + $0x6] sm:$0x3] %vm129, %v237
    %s239 = sld [smem:[#allocation5 + $0x200]]
    %s240 = scalar_lea.vmem [#allocation6], %s239
    %v241 = vld [vmem:[%s240] sm:$0x1]
    %242 = vst.msk [vmem:[#allocation3] sm:$0x1] %vm92, %v241
    %s243 = sld [smem:[#allocation5 + $0x201]]
    %s244 = scalar_lea.vmem [#allocation6], %s243
    %v245 = vld [vmem:[%s244] sm:$0x1]
    %246 = vst.msk [vmem:[#allocation3 + $0x1] sm:$0x1] %vm92, %v245
    %v247 = vld [vmem:[#allocation3] sm:$0x3]
    %v249 = vsel %vm99, %v237, 0
    %251 = vmatpush.msra.mxu0 0.0
    %252 = vmatpush.msra.mxu0 0.0
    %253 = vmatpush.msra.mxu0 0.0
    %254 = vmatpush.msra.mxu0 0.0
    %255 = vmatpush.msra.mxu0 0.0
    %256 = vmatpush.msra.mxu0 0.0
    %257 = vmatpush.msra.mxu0 0.0
    %258 = vmatpush.msra.mxu0 0.0
    %259 = vmatpush.msra.mxu0 0.0
    %260 = vmatpush.msra.mxu0 0.0
    %261 = vmatpush.msra.mxu0 0.0
    %262 = vmatpush.msra.mxu0 0.0
    %263 = vmatpush.msra.mxu0 %v86
    %264 = vmatpush.msra.mxu0 %v85
    %265 = vmatpush.msra.mxu0 %v84
    %266 = vmatpush.msra.mxu0 %v83
    %267 = vmatmul.f32.gmra.mxu0 %v249
    %v268 = vpop.f32.mrf.mxu0
    %v269 = vadd.f32 0.0, %v268
    %270 = vdwg.mxu0
    %v271 = vadd.f32 %v247, %v269
    %v272 = vadd.f32 %v271, %v125
    %v273 = vtanh.pop %v272
    %274 = vst.msk [vmem:[#allocation2 + $0x8] sm:$0x3] %vm129, %v273
    %s275 = sld [smem:[#allocation5 + $0x280]]
    %s276 = scalar_lea.vmem [#allocation6], %s275
    %v277 = vld [vmem:[%s276] sm:$0x1]
    %278 = vst.msk [vmem:[#allocation3] sm:$0x1] %vm92, %v277
    %s279 = sld [smem:[#allocation5 + $0x281]]
    %s280 = scalar_lea.vmem [#allocation6], %s279
    %v281 = vld [vmem:[%s280] sm:$0x1]
    %282 = vst.msk [vmem:[#allocation3 + $0x1] sm:$0x1] %vm92, %v281
    %v283 = vld [vmem:[#allocation3] sm:$0x3]
    %v285 = vsel %vm99, %v273, 0
    %287 = vmatpush.msra.mxu0 0.0
    %288 = vmatpush.msra.mxu0 0.0
    %289 = vmatpush.msra.mxu0 0.0
    %290 = vmatpush.msra.mxu0 0.0
    %291 = vmatpush.msra.mxu0 0.0
    %292 = vmatpush.msra.mxu0 0.0
    %293 = vmatpush.msra.mxu0 0.0
    %294 = vmatpush.msra.mxu0 0.0
    %295 = vmatpush.msra.mxu0 0.0
    %296 = vmatpush.msra.mxu0 0.0
    %297 = vmatpush.msra.mxu0 0.0
    %298 = vmatpush.msra.mxu0 0.0
    %299 = vmatpush.msra.mxu0 %v86
    %300 = vmatpush.msra.mxu0 %v85
    %301 = vmatpush.msra.mxu0 %v84
    %302 = vmatpush.msra.mxu0 %v83
    %303 = vmatmul.f32.gmra.mxu0 %v285
    %v304 = vpop.f32.mrf.mxu0
    %v305 = vadd.f32 0.0, %v304
    %306 = vdwg.mxu0
    %v307 = vadd.f32 %v283, %v305
    %v308 = vadd.f32 %v307, %v125
    %v309 = vtanh.pop %v308
    %310 = vst.msk [vmem:[#allocation2 + $0xa] sm:$0x3] %vm129, %v309
    %s311 = sld [smem:[#allocation5 + $0x300]]
    %s312 = scalar_lea.vmem [#allocation6], %s311
    %v313 = vld [vmem:[%s312] sm:$0x1]
    %314 = vst.msk [vmem:[#allocation3] sm:$0x1] %vm92, %v313
    %s315 = sld [smem:[#allocation5 + $0x301]]
    %s316 = scalar_lea.vmem [#allocation6], %s315
    %v317 = vld [vmem:[%s316] sm:$0x1]
    %318 = vst.msk [vmem:[#allocation3 + $0x1] sm:$0x1] %vm92, %v317
    %v319 = vld [vmem:[#allocation3] sm:$0x3]
    %v321 = vsel %vm99, %v309, 0
    %323 = vmatpush.msra.mxu0 0.0
    %324 = vmatpush.msra.mxu0 0.0
    %325 = vmatpush.msra.mxu0 0.0
    %326 = vmatpush.msra.mxu0 0.0
    %327 = vmatpush.msra.mxu0 0.0
    %328 = vmatpush.msra.mxu0 0.0
    %329 = vmatpush.msra.mxu0 0.0
    %330 = vmatpush.msra.mxu0 0.0
    %331 = vmatpush.msra.mxu0 0.0
    %332 = vmatpush.msra.mxu0 0.0
    %333 = vmatpush.msra.mxu0 0.0
    %334 = vmatpush.msra.mxu0 0.0
    %335 = vmatpush.msra.mxu0 %v86
    %336 = vmatpush.msra.mxu0 %v85
    %337 = vmatpush.msra.mxu0 %v84
    %338 = vmatpush.msra.mxu0 %v83
    %339 = vmatmul.f32.gmra.mxu0 %v321
    %v340 = vpop.f32.mrf.mxu0
    %v341 = vadd.f32 0.0, %v340
    %342 = vdwg.mxu0
    %v343 = vadd.f32 %v319, %v341
    %v344 = vadd.f32 %v343, %v125
    %v345 = vtanh.pop %v344
    %346 = vst.msk [vmem:[#allocation2 + $0xc] sm:$0x3] %vm129, %v345
    %s347 = sld [smem:[#allocation5 + $0x380]]
    %s348 = scalar_lea.vmem [#allocation6], %s347
    %v349 = vld [vmem:[%s348] sm:$0x1]
    %350 = vst.msk [vmem:[#allocation3] sm:$0x1] %vm92, %v349
    %s351 = sld [smem:[#allocation5 + $0x381]]
    %s352 = scalar_lea.vmem [#allocation6], %s351
    %v353 = vld [vmem:[%s352] sm:$0x1]
    %354 = vst.msk [vmem:[#allocation3 + $0x1] sm:$0x1] %vm92, %v353
    %v355 = vld [vmem:[#allocation3] sm:$0x3]
    %v357 = vsel %vm99, %v345, 0
    %359 = vmatpush.msra.mxu0 0.0
    %360 = vmatpush.msra.mxu0 0.0
    %361 = vmatpush.msra.mxu0 0.0
    %362 = vmatpush.msra.mxu0 0.0
    %363 = vmatpush.msra.mxu0 0.0
    %364 = vmatpush.msra.mxu0 0.0
    %365 = vmatpush.msra.mxu0 0.0
    %366 = vmatpush.msra.mxu0 0.0
    %367 = vmatpush.msra.mxu0 0.0
    %368 = vmatpush.msra.mxu0 0.0
    %369 = vmatpush.msra.mxu0 0.0
    %370 = vmatpush.msra.mxu0 0.0
    %371 = vmatpush.msra.mxu0 %v86
    %372 = vmatpush.msra.mxu0 %v85
    %373 = vmatpush.msra.mxu0 %v84
    %374 = vmatpush.msra.mxu0 %v83
    %375 = vmatmul.f32.gmra.mxu0 %v357
    %v376 = vpop.f32.mrf.mxu0
    %v377 = vadd.f32 0.0, %v376
    %378 = vdwg.mxu0
    %v379 = vadd.f32 %v355, %v377
    %v380 = vadd.f32 %v379, %v125
    %v381 = vtanh.pop %v380
    %382 = vst.msk [vmem:[#allocation2 + $0xe] sm:$0x3] %vm129, %v381
    %383 = vst.msk [vmem:[#allocation13] sm:$0x3] %vm129, %v381
    %v384 = vld [vmem:[#allocation2] sm:$0xff]
    %v385 = vld [vmem:[#allocation2 + $0x8] sm:$0xff]
    %v386 = vld [vmem:[#allocation11] sm:$0xff]
    %v387 = vld [vmem:[#allocation11 + $0x8] sm:$0xff]
    %v388 = vld [vmem:[#allocation11 + $0x10] sm:$0xff]
    %v389 = vld [vmem:[#allocation11 + $0x18] sm:$0xff]
    %v390 = vld [vmem:[%s6] sm:$0x1]
    %v392 = vperm.slane %v390, 0
    %v395 = vsel %vm99, %v384, 0
    %v398 = vsel %vm99, %v385, 0
    %400 = vmatpush.msra.mxu0 0.0
    %401 = vmatpush.msra.mxu0 0.0
    %402 = vmatpush.msra.mxu0 0.0
    %403 = vmatpush.msra.mxu0 0.0
    %404 = vmatpush.msra.mxu0 0.0
    %405 = vmatpush.msra.mxu0 0.0
    %406 = vmatpush.msra.mxu0 0.0
    %407 = vmatpush.msra.mxu0 0.0
    %408 = vmatpush.msra.mxu0 0.0
    %409 = vmatpush.msra.mxu0 0.0
    %410 = vmatpush.msra.mxu0 0.0
    %411 = vmatpush.msra.mxu0 0.0
    %412 = vmatpush.msra.mxu0 %v389
    %413 = vmatpush.msra.mxu0 %v388
    %414 = vmatpush.msra.mxu0 %v387
    %415 = vmatpush.msra.mxu0 %v386
    %416 = vmatmul.f32.gmra.mxu0 %v395
    %v417 = vpop.f32.mrf.mxu0
    %v418 = vadd.f32 %v392, %v417
    %419 = vmatmul.f32.gmra.mxu0 %v398
    %v420 = vpop.f32.mrf.mxu0
    %v421 = vadd.f32 %v392, %v420
    %422 = vdwg.mxu0
    %vm423 = vcmask 228352
    %424 = vst.msk [vmem:[#allocation12] sm:$0xff] %vm423, %v418
    %425 = vst.msk [vmem:[#allocation12 + $0x8] sm:$0xff] %vm423, %v421
    // Predicated region
    $region38: #{rnn_model_forward.1} parent=1 // pred_check
      _
    $region39: #{rnn_model_forward.1} parent=1 // pred_check_branch
      %427 = sbr.rel (0) target = $region41
    $region40: #{rnn_model_forward.1} parent=1 // pred_region
      %429 = vsyncadd [#allocation8], 0
      %s430 = sshll.u32 [#allocation12], 4
      %s431 = int_to_ptr.vmem [resolvable:$true] %s430
      %s432 = sshll.u32 %s7, 4
      %s433 = int_to_ptr.hbm [resolvable:$true] %s432
      %438 = dma.vmem_to_hbm [thread:$0]  %s431, 256, %s433, [#allocation8], 128, 128, 8
    $region41: #{rnn_model_forward.1} parent=1 // pred_fallthru
      _
    // Predicated region
    $region42: #{rnn_model_forward.1} parent=1 // pred_check
      _
    $region43: #{rnn_model_forward.1} parent=1 // pred_check_branch
      %440 = sbr.rel (0) target = $region45
    $region44: #{rnn_model_forward.1} parent=1 // pred_region
      %442 = vsyncadd [#allocation14], 0
      %s444 = sshll.u32 [#allocation13], 4
      %s445 = int_to_ptr.vmem [resolvable:$true] %s444
      %s446 = sshll.u32 %s8, 4
      %s447 = int_to_ptr.hbm [resolvable:$true] %s446
      %449 = dma.vmem_to_hbm [thread:$0]  %s445, 32, %s447, [#allocation14]
    $region45: #{rnn_model_forward.1} parent=1 // pred_fallthru
      _
    // Predicated region
    $region46: #{rnn_model_forward.1} parent=1 // pred_check
      _
    $region47: #{rnn_model_forward.1} parent=1 // pred_check_branch
      %451 = sbr.rel (0) target = $region49
    $region48: #{rnn_model_forward.1} parent=1 // pred_region
      %453 = dma.done [#allocation8], 256
    $region49: #{rnn_model_forward.1} parent=1 // pred_fallthru
      _
    // Predicated region
    $region50: #{rnn_model_forward.1} parent=1 // pred_check
      _
    $region51: #{rnn_model_forward.1} parent=1 // pred_check_branch
      %455 = sbr.rel (0) target = $region53
    $region52: #{rnn_model_forward.1} parent=1 // pred_region
      %457 = dma.done [#allocation14], 32
    $region53: #{rnn_model_forward.1} parent=1 // pred_fallthru
      _
    %458 = vsyncpa [#allocation7], 1
    %459 = vsyncpa [#allocation10], 1
    %460 = vsyncpa [#allocation8], 1
    %461 = vsyncpa [#allocation14], 1

</llo_original>
